<compile_context>
chip_gen: v7x
topology: tpu7x:2x2x1
jax: 0.10.0
libtpu: 0.0.40
codegen_flags: <defaults>
</compile_context>

<pallas_src>
import jax
import jax.numpy as jnp
from jax.experimental import pallas as pl
from jax.experimental.pallas import tpu as pltpu


def _round_up(x: int, m: int) -> int:
    return ((x + m - 1) // m) * m


def _gather_logits(idx_col, emb_ref):
    """One-hot MXU gather: (TILE_BT, 1) int32 indices -> (TILE_BT, V) f32 logits."""
    tile_bt = idx_col.shape[0]
    V = emb_ref.shape[-1]
    lane_ids = jax.lax.broadcasted_iota(jnp.int32, (tile_bt, V), 1)
    one_hot = (lane_ids == idx_col).astype(jnp.float32)  # exact 0/1
    logits = jnp.dot(one_hot, emb_ref[...], preferred_element_type=jnp.float32)
    return logits, lane_ids


def _nll_rows(logits, lane_ids, tgt_col):
    """Numerically stable per-row cross-entropy. Returns (TILE_BT, 1) f32."""
    m = jnp.max(logits, axis=-1, keepdims=True)
    lse = m + jnp.log(jnp.sum(jnp.exp(logits - m), axis=-1, keepdims=True))
    picked = jnp.sum(jnp.where(lane_ids == tgt_col, logits, 0.0),
                     axis=-1, keepdims=True)
    return lse - picked


def _bigram_logits_kernel(idx_ref, emb_ref, logits_ref):
    """Inference path: pure batched gather, no loss work."""
    logits, _ = _gather_logits(idx_ref[...], emb_ref)
    logits_ref[...] = logits


def _bigram_loss_kernel(idx_ref, tgt_ref, emb_ref, logits_ref, nll_ref):
    """Training path: batched gather + per-position NLL (no cross-step state)."""
    logits, lane_ids = _gather_logits(idx_ref[...], emb_ref)
    logits_ref[...] = logits
    nll_ref[...] = _nll_rows(logits, lane_ids, tgt_ref[...])


def _bigram_loss_only_kernel(idx_ref, tgt_ref, emb_ref, nll_ref):
    """Loss-only path: skip the logits HBM writeback entirely."""
    logits, lane_ids = _gather_logits(idx_ref[...], emb_ref)
    nll_ref[...] = _nll_rows(logits, lane_ids, tgt_ref[...])


def bigram_forward(idx, emb, targets=None, *, tile_bt=512, return_logits=True):
    """Bigram LM forward.

    idx: (B, T) int32, emb: (V, V) f32, targets: optional (B, T) int32.
    Returns (logits (B, T, V), loss or None).  With targets given and
    return_logits=False, returns (None, loss) and skips the logits writeback.
    """
    B, T = idx.shape
    V = emb.shape[0]
    BT = B * T

    # Sublane-aligned position tile; clamp to the (padded) problem size.
    tile_bt = max(8, min(_round_up(tile_bt, 8), _round_up(BT, 8)))
    BT_pad = _round_up(BT, tile_bt)
    num_blocks = BT_pad // tile_bt

    emb = emb.astype(jnp.float32)
    idx_col = jnp.zeros((BT_pad, 1), jnp.int32).at[:BT, 0].set(
        idx.reshape(BT).astype(jnp.int32))

    parallel = pltpu.CompilerParams(dimension_semantics=("parallel",))
    col_spec = pl.BlockSpec((tile_bt, 1), lambda i: (i, 0))
    emb_spec = pl.BlockSpec((V, V), lambda i: (0, 0))        # VMEM-resident table
    logits_spec = pl.BlockSpec((tile_bt, V), lambda i: (i, 0))

    if targets is None:
        logits_pad = pl.pallas_call(
            _bigram_logits_kernel,
            out_shape=jax.ShapeDtypeStruct((BT_pad, V), jnp.float32),
            grid=(num_blocks,),
            in_specs=[col_spec, emb_spec],
            out_specs=logits_spec,
            compiler_params=parallel,
        )(idx_col, emb)
        return logits_pad[:BT].reshape(B, T, V), None

    tgt_col = jnp.zeros((BT_pad, 1), jnp.int32).at[:BT, 0].set(
        targets.reshape(BT).astype(jnp.int32))

    if return_logits:
        logits_pad, nll = pl.pallas_call(
            _bigram_loss_kernel,
            out_shape=(
                jax.ShapeDtypeStruct((BT_pad, V), jnp.float32),
                jax.ShapeDtypeStruct((BT_pad, 1), jnp.float32),
            ),
            grid=(num_blocks,),
            in_specs=[col_spec, col_spec, emb_spec],
            out_specs=(logits_spec, col_spec),
            compiler_params=parallel,
        )(idx_col, tgt_col, emb)
        loss = jnp.mean(nll[:BT, 0])
        return logits_pad[:BT].reshape(B, T, V), loss

    nll = pl.pallas_call(
        _bigram_loss_only_kernel,
        out_shape=jax.ShapeDtypeStruct((BT_pad, 1), jnp.float32),
        grid=(num_blocks,),
        in_specs=[col_spec, col_spec, emb_spec],
        out_specs=col_spec,
        compiler_params=parallel,
    )(idx_col, tgt_col, emb)
    return None, jnp.mean(nll[:BT, 0])


if __name__ == "__main__":
    # Synthetic vocab: in the original script vocab_size = len(set(text));
    # here we pick V=128 (lane-aligned) deterministically.
    V = 128
    B, T = 2, 8

    key = jax.random.PRNGKey(0)
    k_emb, k_idx, k_tgt = jax.random.split(key, 3)

    # nn.Embedding default init ~ N(0, 1)
    emb = jax.random.normal(k_emb, (V, V), dtype=jnp.float32)
    idx = jax.random.randint(k_idx, (B, T), 0, V, dtype=jnp.int32)
    targets = jax.random.randint(k_tgt, (B, T), 0, V, dtype=jnp.int32)

    # Training path: logits + loss
    logits, loss = bigram_forward(idx, emb, targets)
    logits, loss = jax.block_until_ready((logits, loss))

    # Inference path: logits only (targets=None)
    logits_nl, loss_nl = bigram_forward(idx, emb)
    logits_nl = jax.block_until_ready(logits_nl)

    # Loss-only path (skips logits HBM writeback)
    _, loss_only = bigram_forward(idx, emb, targets, return_logits=False)
    loss_only = jax.block_until_ready(loss_only)

    # Multi-block + padding exercise (BT=51 not a multiple of the tile)
    B2, T2 = 3, 17
    idx2 = jax.random.randint(jax.random.PRNGKey(1), (B2, T2), 0, V, jnp.int32)
    tgt2 = jax.random.randint(jax.random.PRNGKey(2), (B2, T2), 0, V, jnp.int32)
    logits2, loss2 = bigram_forward(idx2, emb, tgt2, tile_bt=16)
    logits2, loss2 = jax.block_until_ready((logits2, loss2))

    # Pure-JAX reference (embedding lookup + mean cross-entropy)
    def ref_fwd(i, e, t):
        rl = e[i].reshape(-1, V)
        rt = t.reshape(-1)
        lse = jax.scipy.special.logsumexp(rl, axis=-1)
        return e[i], jnp.mean(lse - rl[jnp.arange(rl.shape[0]), rt])

    ref_logits, ref_loss = ref_fwd(idx, emb, targets)
    ref_logits2, ref_loss2 = ref_fwd(idx2, emb, tgt2)

    assert logits.shape == (B, T, V)
    assert jnp.allclose(logits, ref_logits, atol=1e-5, rtol=1e-5)
    assert jnp.allclose(logits_nl, ref_logits, atol=1e-5, rtol=1e-5)
    assert loss_nl is None
    assert jnp.allclose(loss, ref_loss, atol=1e-5, rtol=1e-5)
    assert jnp.allclose(loss_only, ref_loss, atol=1e-5, rtol=1e-5)
    assert logits2.shape == (B2, T2, V)
    assert jnp.allclose(logits2, ref_logits2, atol=1e-5, rtol=1e-5)
    assert jnp.allclose(loss2, ref_loss2, atol=1e-5, rtol=1e-5)

    print("KERNEL_OK")
</pallas_src>

<mosaic_0001>
module attributes {stable_mosaic.version = 11 : i64} {
  func.func @_bigram_loss_kernel(%arg0: i32, %arg1: memref<16x1xi32, #tpu.memory_space<vmem>>, %arg2: memref<16x1xi32, #tpu.memory_space<vmem>>, %arg3: memref<128x128xf32, #tpu.memory_space<vmem>>, %arg4: memref<16x128xf32, #tpu.memory_space<vmem>>, %arg5: memref<16x1xf32, #tpu.memory_space<vmem>>) attributes {dimension_semantics = [#tpu.dimension_semantics<parallel>], iteration_bounds = array<i64: 1>, scalar_prefetch = 0 : i64, scratch_operands = 0 : i64, tpu.core_type = #tpu.core_type<tc>, window_params = [{transform_indices = @transform_0, window_bounds = array<i64: 16, 1>}, {transform_indices = @transform_1, window_bounds = array<i64: 16, 1>}, {pipeline_mode = #tpu.pipeline_mode<synchronous>, transform_indices = @transform_2, window_bounds = array<i64: 128, 128>}, {transform_indices = @transform_3, window_bounds = array<i64: 16, 128>}, {transform_indices = @transform_4, window_bounds = array<i64: 16, 1>}]} {
    %c0 = arith.constant 0 : index
    %c0_0 = arith.constant 0 : index
    %0 = vector.load %arg1[%c0, %c0_0] : memref<16x1xi32, #tpu.memory_space<vmem>>, vector<16x1xi32>
    %1 = tpu.iota {dimensions = array<i32: 1>} : vector<16x128xi32>
    %2 = vector.broadcast %0 : vector<16x1xi32> to vector<16x128xi32>
    %3 = arith.cmpi eq, %1, %2 : vector<16x128xi32>
    %4 = arith.extui %3 : vector<16x128xi1> to vector<16x128xi32>
    %5 = arith.sitofp %4 : vector<16x128xi32> to vector<16x128xf32>
    %c0_1 = arith.constant 0 : index
    %c0_2 = arith.constant 0 : index
    %6 = vector.load %arg3[%c0_1, %c0_2] : memref<128x128xf32, #tpu.memory_space<vmem>>, vector<128x128xf32>
    %cst = arith.constant dense<0.000000e+00> : vector<16x128xf32>
    %7 = tpu.matmul %5, %6, %cst {dimension_numbers = #tpu.dot_dimension_numbers<[1], [0], [0], [1], [0, 0, 1, 1], [], []>} : vector<16x128xf32>, vector<128x128xf32>, vector<16x128xf32> -> vector<16x128xf32>
    %c0_3 = arith.constant 0 : index
    %c0_4 = arith.constant 0 : index
    %8 = vector.load %arg4[%c0_3, %c0_4] : memref<16x128xf32, #tpu.memory_space<vmem>>, vector<16x128xf32>
    tpu.vector_store %arg4[%c0_3, %c0_4], %7 {strides = array<i32>} : memref<16x128xf32, #tpu.memory_space<vmem>>, vector<16x128xf32>,
    %c0_5 = arith.constant 0 : index
    %c0_6 = arith.constant 0 : index
    %9 = vector.load %arg2[%c0_5, %c0_6] : memref<16x1xi32, #tpu.memory_space<vmem>>, vector<16x1xi32>
    %cst_7 = arith.constant dense<0xFF800000> : vector<16xf32>
    %10 = vector.multi_reduction <maximumf>, %7, %cst_7 [1] : vector<16x128xf32> to vector<16xf32>
    %11 = vector.shape_cast %10 : vector<16xf32> to vector<16x1xf32>
    %12 = vector.broadcast %11 : vector<16x1xf32> to vector<16x128xf32>
    %13 = arith.subf %7, %12 : vector<16x128xf32>
    %14 = math.exp %13 : vector<16x128xf32>
    %cst_8 = arith.constant dense<0.000000e+00> : vector<16xf32>
    %15 = vector.multi_reduction <add>, %14, %cst_8 [1] : vector<16x128xf32> to vector<16xf32>
    %16 = vector.shape_cast %15 : vector<16xf32> to vector<16x1xf32>
    %17 = math.log %16 : vector<16x1xf32>
    %18 = arith.addf %11, %17 : vector<16x1xf32>
    %19 = vector.broadcast %9 : vector<16x1xi32> to vector<16x128xi32>
    %20 = arith.cmpi eq, %1, %19 : vector<16x128xi32>
    %cst_9 = arith.constant 0.000000e+00 : f32
    %21 = vector.broadcast %cst_9 : f32 to vector<16x128xf32>
    %22 = arith.select %20, %7, %21 : vector<16x128xi1>, vector<16x128xf32>
    %cst_10 = arith.constant dense<0.000000e+00> : vector<16xf32>
    %23 = vector.multi_reduction <add>, %22, %cst_10 [1] : vector<16x128xf32> to vector<16xf32>
    %24 = vector.shape_cast %23 : vector<16xf32> to vector<16x1xf32>
    %25 = arith.subf %18, %24 : vector<16x1xf32>
    %c0_11 = arith.constant 0 : index
    %c0_12 = arith.constant 0 : index
    %26 = vector.load %arg5[%c0_11, %c0_12] : memref<16x1xf32, #tpu.memory_space<vmem>>, vector<16x1xf32>
    tpu.vector_store %arg5[%c0_11, %c0_12], %25 {strides = array<i32>} : memref<16x1xf32, #tpu.memory_space<vmem>>, vector<16x1xf32>,
    return
  }
  func.func @transform_0(%arg0: i32) -> (i32, i32) {
    %c0_i32 = arith.constant 0 : i32
    %c0_i32_0 = arith.constant 0 : i32
    return %arg0, %c0_i32 : i32, i32
  }
  func.func @transform_1(%arg0: i32) -> (i32, i32) {
    %c0_i32 = arith.constant 0 : i32
    %c0_i32_0 = arith.constant 0 : i32
    return %arg0, %c0_i32 : i32, i32
  }
  func.func @transform_2(%arg0: i32) -> (i32, i32) {
    %c0_i32 = arith.constant 0 : i32
    %c0_i32_0 = arith.constant 0 : i32
    %c0_i32_1 = arith.constant 0 : i32
    return %c0_i32, %c0_i32_0 : i32, i32
  }
  func.func @transform_3(%arg0: i32) -> (i32, i32) {
    %c0_i32 = arith.constant 0 : i32
    %c0_i32_0 = arith.constant 0 : i32
    return %arg0, %c0_i32 : i32, i32
  }
  func.func @transform_4(%arg0: i32) -> (i32, i32) {
    %c0_i32 = arith.constant 0 : i32
    %c0_i32_0 = arith.constant 0 : i32
    return %arg0, %c0_i32 : i32, i32
  }
}

</mosaic_0001>

<llo_original>
// kernel: tpu_custom_call.1
$region0: #{tpu_custom_call.1}
  #allocation0 [shape = 'u32[]', space=smem, size = 0x4, offset = 0x4, fixed_abs, tag = 'smem constant byte address 0x4 - core index']
  #allocation1 [shape = 'u32[144,128]{1,0:T(1,128)}', space=vmem, size = 0x12000, scoped, tag = 'internal scratch']
  %s0 = inlined_call_operand.vmem [shape: s32[16,1], index: 0, kind: input, shape index: {}]
  %s1 = inlined_call_operand.vmem [shape: s32[16,1], index: 1, kind: input, shape index: {}]
  %s2 = inlined_call_operand.hbm [shape: f32[128,128], index: 2, kind: input, shape index: {}]
  %s3 = inlined_call_operand.hbm [shape: f32[16,128], index: 3, kind: output, shape index: {0}]
  %s4 = inlined_call_operand.vmem [shape: f32[16,1], index: 4, kind: output, shape index: {1}]
  %5 = xla_tuple %s3, %s4
  %s6 = sld [smem:[#allocation0]]
  $region34: #{tpu_custom_call.1} parent=0
    _
  %s8 = ssub.s32 1, %s6
  %s9 = scalar_select 0, %s8, %s6
  $region1: #{tpu_custom_call.1} parent=0
    #allocation2 [shape = 'u8[65536]{0}', space=vmem, size = 0x10000, scoped, tag = 'input window, operand 2, single buffered']
    #allocation3 [shape = 's32[1]{0}', space=sflag, size = 0x4, scoped, tag = 'scoped memory for tpu_custom_call.1']
    #allocation4 [shape = 's32[1]{0}', space=sflag, size = 0x4, scoped, tag = 'scoped memory for tpu_custom_call.1']
    #allocation5 [shape = 'u8[8192]{0}', space=vmem, size = 0x2000, scoped, tag = 'output window, operand 0, single buffered']
    %10 = vsyncpa [#allocation3], 0
    %11 = vsyncpa [#allocation4], 0
    // Predicated region
    $region2: #{tpu_custom_call.1} parent=1 // pred_check
      _
    $region3: #{tpu_custom_call.1} parent=1 // pred_check_branch
      %13 = sbr.rel (0) target = $region5
    $region4: #{tpu_custom_call.1} parent=1 // pred_region
      _
    $region5: #{tpu_custom_call.1} parent=1 // pred_fallthru
      _
    // Predicated region
    $region6: #{tpu_custom_call.1} parent=1 // pred_check
      _
    $region7: #{tpu_custom_call.1} parent=1 // pred_check_branch
      %15 = sbr.rel (0) target = $region9
    $region8: #{tpu_custom_call.1} parent=1 // pred_region
      _
    $region9: #{tpu_custom_call.1} parent=1 // pred_fallthru
      _
    // Predicated region
    $region10: #{tpu_custom_call.1} parent=1 // pred_check
      _
    $region11: #{tpu_custom_call.1} parent=1 // pred_check_branch
      %17 = sbr.rel (0) target = $region13
    $region12: #{tpu_custom_call.1} parent=1 // pred_region
      %s19 = ssub.s32 2048, 2048
      %20 = vsyncadd [#allocation3], %s19
      %s21 = sshll.u32 [#allocation2], 4
      %s22 = int_to_ptr.vmem [resolvable:$true] %s21
      %27 = dma.hbm_to_vmem [thread:$0]  %s2, 2048, %s22, [#allocation3], 128, 128, 8
    $region13: #{tpu_custom_call.1} parent=1 // pred_fallthru
      _
    // Predicated region
    $region14: #{tpu_custom_call.1} parent=1 // pred_check
      _
    $region15: #{tpu_custom_call.1} parent=1 // pred_check_branch
      %29 = sbr.rel (0) target = $region17
    $region16: #{tpu_custom_call.1} parent=1 // pred_region
      %30 = dma.done [#allocation3], 2048
    $region17: #{tpu_custom_call.1} parent=1 // pred_fallthru
      _
    %v31 = vld [vmem:[%s0] sm:$0xff]
    %v32 = vld [vmem:[%s0 + $0x8] sm:$0xff]
    %v33 = vlaneseq
    %v34 = vand.u32 %v33, 127
    %35 = vset.pattern.permute.xlu0 0
    %36 = vperm.xlu0 %35, %v31
    %v37 = vpop.permute.xlu0 %36
    %38 = vset.pattern.permute.xlu0 0
    %39 = vperm.xlu0 %38, %v32
    %v40 = vpop.permute.xlu0 %39
    %vm41 = vcmp.eq.s32.totalorder %v34, %v37
    %vm42 = vcmp.eq.s32.totalorder %v34, %v40
    %v43 = vsel %vm41, 1, 0
    %v44 = vsel %vm42, 1, 0
    %v45 = vcvt.s32.f32 %v43
    %v46 = vcvt.s32.f32 %v44
    %v47 = vld [vmem:[#allocation2] sm:$0xff]
    %v48 = vld [vmem:[#allocation2 + $0x8] sm:$0xff]
    %v49 = vld [vmem:[#allocation2 + $0x10] sm:$0xff]
    %v50 = vld [vmem:[#allocation2 + $0x18] sm:$0xff]
    %v51 = vld [vmem:[#allocation2 + $0x20] sm:$0xff]
    %v52 = vld [vmem:[#allocation2 + $0x28] sm:$0xff]
    %v53 = vld [vmem:[#allocation2 + $0x30] sm:$0xff]
    %v54 = vld [vmem:[#allocation2 + $0x38] sm:$0xff]
    %v55 = vld [vmem:[#allocation2 + $0x40] sm:$0xff]
    %v56 = vld [vmem:[#allocation2 + $0x48] sm:$0xff]
    %v57 = vld [vmem:[#allocation2 + $0x50] sm:$0xff]
    %v58 = vld [vmem:[#allocation2 + $0x58] sm:$0xff]
    %v59 = vld [vmem:[#allocation2 + $0x60] sm:$0xff]
    %v60 = vld [vmem:[#allocation2 + $0x68] sm:$0xff]
    %v61 = vld [vmem:[#allocation2 + $0x70] sm:$0xff]
    %v62 = vld [vmem:[#allocation2 + $0x78] sm:$0xff]
    %63 = vmatprep.subr.mxu0 0.0
    %64 = vmatpush1.msra.mxu0 %v47
    %65 = vmatprep.subr.mxu0 0.0
    %66 = vmatpush1.msra.mxu0 %v48
    %67 = vmatprep.subr.mxu0 0.0
    %68 = vmatpush1.msra.mxu0 %v49
    %69 = vmatprep.subr.mxu0 0.0
    %70 = vmatpush1.msra.mxu0 %v50
    %71 = vmatprep.subr.mxu0 0.0
    %72 = vmatpush1.msra.mxu0 %v51
    %73 = vmatprep.subr.mxu0 0.0
    %74 = vmatpush1.msra.mxu0 %v52
    %75 = vmatprep.subr.mxu0 0.0
    %76 = vmatpush1.msra.mxu0 %v53
    %77 = vmatprep.subr.mxu0 0.0
    %78 = vmatpush1.msra.mxu0 %v54
    %79 = vmatprep.subr.mxu0 0.0
    %80 = vmatpush1.msra.mxu0 %v55
    %81 = vmatprep.subr.mxu0 0.0
    %82 = vmatpush1.msra.mxu0 %v56
    %83 = vmatprep.subr.mxu0 0.0
    %84 = vmatpush1.msra.mxu0 %v57
    %85 = vmatprep.subr.mxu0 0.0
    %86 = vmatpush1.msra.mxu0 %v58
    %87 = vmatprep.subr.mxu0 0.0
    %88 = vmatpush1.msra.mxu0 %v59
    %89 = vmatprep.subr.mxu0 0.0
    %90 = vmatpush1.msra.mxu0 %v60
    %91 = vmatprep.subr.mxu0 0.0
    %92 = vmatpush1.msra.mxu0 %v61
    %93 = vmatprep.subr.mxu0 0.0
    %94 = vmatpush1.msra.mxu0 %v62
    %95 = vmatprep.subr.mxu0 0.0
    %96 = vmatpush1.msra.mxu0 0.0
    %97 = vmatprep.subr.mxu0 0.0
    %98 = vmatpush1.msra.mxu0 0.0
    %99 = vmatprep.subr.mxu0 0.0
    %100 = vmatpush1.msra.mxu0 0.0
    %101 = vmatprep.subr.mxu0 0.0
    %102 = vmatpush1.msra.mxu0 0.0
    %103 = vmatprep.subr.mxu0 0.0
    %104 = vmatpush1.msra.mxu0 0.0
    %105 = vmatprep.subr.mxu0 0.0
    %106 = vmatpush1.msra.mxu0 0.0
    %107 = vmatprep.subr.mxu0 0.0
    %108 = vmatpush1.msra.mxu0 0.0
    %109 = vmatprep.subr.mxu0 0.0
    %110 = vmatpush1.msra.mxu0 0.0
    %111 = vmatprep.subr.mxu0 0.0
    %112 = vmatpush1.msra.mxu0 0.0
    %113 = vmatprep.subr.mxu0 0.0
    %114 = vmatpush1.msra.mxu0 0.0
    %115 = vmatprep.subr.mxu0 0.0
    %116 = vmatpush1.msra.mxu0 0.0
    %117 = vmatprep.subr.mxu0 0.0
    %118 = vmatpush1.msra.mxu0 0.0
    %119 = vmatprep.subr.mxu0 0.0
    %120 = vmatpush1.msra.mxu0 0.0
    %121 = vmatprep.subr.mxu0 0.0
    %122 = vmatpush1.msra.mxu0 0.0
    %123 = vmatprep.subr.mxu0 0.0
    %124 = vmatpush1.msra.mxu0 0.0
    %125 = vmatprep.subr.mxu0 0.0
    %126 = vmatpush1.msra.mxu0 0.0
    %127 = vmatprep.mubr.f32.mxu0 0.0
    %128 = vmatmul.mubr.f32.gmra.mrb[0].mxu0 %v45
    %v129 = vpop.f32.mrb[0].mxu0
    %v130 = vadd.f32 0.0, %v129
    %v131 = vpop.f32.mrb[0].mxu0
    %132 = vmatprep.mubr.f32.mxu0 0.0
    %133 = vmatmul.mubr.f32.gmra.mrb[0].mxu0 %v46
    %v134 = vpop.f32.mrb[0].mxu0
    %v135 = vadd.f32 0.0, %v134
    %v136 = vpop.f32.mrb[0].mxu0
    %137 = vdwg.mxu0
    %138 = vst [vmem:[#allocation5] sm:$0xff] %v130
    %139 = vst [vmem:[#allocation5 + $0x8] sm:$0xff] %v135
    %v140 = vld [vmem:[%s1] sm:$0xff]
    %v141 = vld [vmem:[%s1 + $0x8] sm:$0xff]
    %142 = vmax.xlane.f32.xlu0 %v130
    %v143 = vpop.xlane.xlu0 %142
    %144 = vmax.xlane.f32.xlu0 %v135
    %v145 = vpop.xlane.xlu0 %144
    %v146 = vsub.f32 %v130, %v143
    %v147 = vsub.f32 %v135, %v145
    %v148 = vmul.f32 %v146, 1.442695
    %v149 = vpow.pop %v148
    %v150 = vmul.f32 %v147, 1.442695
    %v151 = vpow.pop %v150
    %152 = vadd.xlane.f32.xlu0 %v149
    %v153 = vpop.xlane.xlu0 %152
    %154 = vadd.xlane.f32.xlu0 %v151
    %v155 = vpop.xlane.xlu0 %154
    %v156 = vlog2.pop %v153
    %v157 = vmul.f32 %v156, 0.6931472
    %v158 = vlog2.pop %v155
    %v159 = vmul.f32 %v158, 0.6931472
    %v160 = vadd.f32 %v143, %v157
    %v161 = vadd.f32 %v145, %v159
    %162 = vset.pattern.permute.xlu0 0
    %163 = vperm.xlu0 %162, %v140
    %v164 = vpop.permute.xlu0 %163
    %165 = vset.pattern.permute.xlu0 0
    %166 = vperm.xlu0 %165, %v141
    %v167 = vpop.permute.xlu0 %166
    %vm168 = vcmp.eq.s32.totalorder %v34, %v164
    %vm169 = vcmp.eq.s32.totalorder %v34, %v167
    %v170 = vsel %vm168, %v130, 0.0
    %v171 = vsel %vm169, %v135, 0.0
    %172 = vadd.xlane.f32.xlu0 %v170
    %v173 = vpop.xlane.xlu0 %172
    %174 = vadd.xlane.f32.xlu0 %v171
    %v175 = vpop.xlane.xlu0 %174
    %v176 = vsub.f32 %v160, %v173
    %v177 = vsub.f32 %v161, %v175
    %vm178 = vcmask 7168
    %179 = vst.msk [vmem:[%s4] sm:$0xff] %vm178, %v176
    %180 = vst.msk [vmem:[%s4 + $0x8] sm:$0xff] %vm178, %v177
    // Predicated region
    $region18: #{tpu_custom_call.1} parent=1 // pred_check
      _
    $region19: #{tpu_custom_call.1} parent=1 // pred_check_branch
      %182 = sbr.rel (0) target = $region21
    $region20: #{tpu_custom_call.1} parent=1 // pred_region
      %s184 = ssub.s32 256, 256
      %185 = vsyncadd [#allocation4], %s184
      %s186 = sshll.u32 [#allocation5], 4
      %s187 = int_to_ptr.vmem [resolvable:$true] %s186
      %192 = dma.vmem_to_hbm [thread:$0]  %s187, 256, %s3, [#allocation4], 128, 128, 8
    $region21: #{tpu_custom_call.1} parent=1 // pred_fallthru
      _
    // Predicated region
    $region22: #{tpu_custom_call.1} parent=1 // pred_check
      _
    $region23: #{tpu_custom_call.1} parent=1 // pred_check_branch
      %194 = sbr.rel (0) target = $region25
    $region24: #{tpu_custom_call.1} parent=1 // pred_region
      _
    $region25: #{tpu_custom_call.1} parent=1 // pred_fallthru
      _
    // Predicated region
    $region26: #{tpu_custom_call.1} parent=1 // pred_check
      _
    $region27: #{tpu_custom_call.1} parent=1 // pred_check_branch
      %196 = sbr.rel (0) target = $region29
    $region28: #{tpu_custom_call.1} parent=1 // pred_region
      %197 = dma.done [#allocation4], 256
    $region29: #{tpu_custom_call.1} parent=1 // pred_fallthru
      _
    // Predicated region
    $region30: #{tpu_custom_call.1} parent=1 // pred_check
      _
    $region31: #{tpu_custom_call.1} parent=1 // pred_check_branch
      %199 = sbr.rel (0) target = $region33
    $region32: #{tpu_custom_call.1} parent=1 // pred_region
      _
    $region33: #{tpu_custom_call.1} parent=1 // pred_fallthru
      _
    %200 = vsyncpa [#allocation3], 1
    %201 = vsyncpa [#allocation4], 1

</llo_original>
